<compile_context>
chip_gen: v6e
topology: v6e:2x2x1
jax: 0.10.0
libtpu: 0.0.40
codegen_flags: <defaults>
</compile_context>

<pallas_src>
import functools

import jax
import jax.numpy as jnp
from jax.experimental import pallas as pl
from jax.experimental.pallas import tpu as pltpu


def _round_up(n: int, m: int) -> int:
    return ((n + m - 1) // m) * m


def mlp_kernel(x_ref, w1_ref, b1_ref, w2_ref, b2_ref, o_ref):
    # hidden = relu(x @ W1 + b1), accumulate in f32, epilogue in f32.
    h = jnp.dot(x_ref[...], w1_ref[...], preferred_element_type=jnp.float32)
    h = jnp.maximum(h + b1_ref[...], 0.0)  # (1, 256) bias broadcasts over rows
    # out = h @ W2 + b2; cast h to the weight dtype for the MXU, accumulate in f32.
    out = jnp.dot(h.astype(w2_ref.dtype), w2_ref[...],
                  preferred_element_type=jnp.float32)
    o_ref[...] = (out + b2_ref[...]).astype(o_ref.dtype)


@functools.partial(jax.jit, static_argnames=("compute_dtype", "block_b"))
def mlp_forward(x, w1, b1, w2, b2, *, compute_dtype=jnp.bfloat16, block_b=512):
    """x: (B, 20); w1: (20, 256); b1: (256,); w2: (256, 10); b2: (10,)."""
    B, d_in = x.shape
    d_h = w1.shape[1]
    d_out = w2.shape[1]
    out_dtype = x.dtype

    # Batch tile: multiple of 8 (f32 sublane tile), capped at block_b.
    tb = min(_round_up(block_b, 8), _round_up(B, 8))
    b_pad = _round_up(B, tb)
    n_tiles = b_pad // tb

    # Cast x and weights to the compute dtype (bf16 halves the dominant HBM traffic);
    # keep biases in f32 so the epilogue stays on the f32 accumulator path.
    xc = x.astype(compute_dtype)
    if b_pad != B:
        xc = jnp.pad(xc, ((0, b_pad - B), (0, 0)))
    w1c = w1.astype(compute_dtype)
    w2c = w2.astype(compute_dtype)
    b1_2d = b1.astype(jnp.float32).reshape(1, d_h)
    b2_2d = b2.astype(jnp.float32).reshape(1, d_out)

    # Tile-derived VMEM budget (v7x only has 64 MiB physical; default scoped limit 32 MiB).
    cd_sz = jnp.dtype(compute_dtype).itemsize
    out_sz = jnp.dtype(out_dtype).itemsize
    resident_w = (d_in * d_h + d_h * d_out) * cd_sz + (d_h + d_out) * 4
    io_bufs = 2 * tb * d_in * cd_sz + 2 * tb * d_out * out_sz  # double-buffered x / out
    h_tmp = tb * d_h * 4                                       # f32 hidden activation
    vmem_needed = 2 * resident_w + io_bufs + 2 * h_tmp
    vmem_limit = int(min(48 * 1024 * 1024, max(4 * 1024 * 1024, 4 * vmem_needed)))

    cost = pl.CostEstimate(
        flops=2 * b_pad * (d_in * d_h + d_h * d_out),
        transcendentals=0,
        bytes_accessed=(b_pad * d_in * cd_sz + resident_w + b_pad * d_out * out_sz),
    )

    out_padded = pl.pallas_call(
        mlp_kernel,
        out_shape=jax.ShapeDtypeStruct((b_pad, d_out), out_dtype),
        grid_spec=pl.GridSpec(
            grid=(n_tiles,),
            in_specs=[
                pl.BlockSpec((tb, d_in), lambda i: (i, 0)),      # x tile, pipelined
                pl.BlockSpec((d_in, d_h), lambda i: (0, 0)),     # W1 resident
                pl.BlockSpec((1, d_h), lambda i: (0, 0)),        # b1 resident
                pl.BlockSpec((d_h, d_out), lambda i: (0, 0)),    # W2 resident
                pl.BlockSpec((1, d_out), lambda i: (0, 0)),      # b2 resident
            ],
            out_specs=pl.BlockSpec((tb, d_out), lambda i: (i, 0)),
        ),
        compiler_params=pltpu.CompilerParams(
            dimension_semantics=("parallel",),
            vmem_limit_bytes=vmem_limit,
        ),
        cost_estimate=cost,
    )(xc, w1c, b1_2d, w2c, b2_2d)

    return out_padded[:B] if b_pad != B else out_padded


def init_params(key):
    """Deterministic init matching nn.Linear shapes (Kaiming-uniform-ish)."""
    k1, k2, k3, k4 = jax.random.split(key, 4)
    in1, h, out = 20, 256, 10
    lim1 = 1.0 / jnp.sqrt(in1)
    lim2 = 1.0 / jnp.sqrt(h)
    # PyTorch stores weight as (out, in); we keep it as (in, out) for the kernel.
    w1 = jax.random.uniform(k1, (in1, h), jnp.float32, -lim1, lim1)
    b1 = jax.random.uniform(k2, (h,), jnp.float32, -lim1, lim1)
    w2 = jax.random.uniform(k3, (h, out), jnp.float32, -lim2, lim2)
    b2 = jax.random.uniform(k4, (out,), jnp.float32, -lim2, lim2)
    return w1, b1, w2, b2


def _ref(x, w1, b1, w2, b2):
    return jnp.maximum(x @ w1 + b1, 0.0) @ w2 + b2


if __name__ == "__main__":
    key = jax.random.PRNGKey(0)
    kx, kp = jax.random.split(key)
    w1, b1, w2, b2 = init_params(kp)

    # Small case from the spec: B=2 rows of 20 features.
    B = 2
    x = jax.random.normal(kx, (B, 20), jnp.float32)
    ref = _ref(x, w1, b1, w2, b2)

    # f32 compute path: exact match to the reference.
    out_f32 = jax.block_until_ready(
        mlp_forward(x, w1, b1, w2, b2, compute_dtype=jnp.float32))
    assert out_f32.shape == (B, 10)
    assert jnp.allclose(out_f32, ref, atol=1e-5, rtol=1e-5)

    # bf16 compute path (default, the perf configuration): f32 accumulation, looser tol.
    out_bf16 = jax.block_until_ready(mlp_forward(x, w1, b1, w2, b2))
    assert out_bf16.shape == (B, 10)
    assert jnp.allclose(out_bf16, ref, atol=5e-2, rtol=5e-2)

    # Exercise batch tiling + padding: B not a multiple of the block size.
    B2 = 300
    x2 = jax.random.normal(jax.random.PRNGKey(1), (B2, 20), jnp.float32)
    ref2 = _ref(x2, w1, b1, w2, b2)
    out2 = jax.block_until_ready(
        mlp_forward(x2, w1, b1, w2, b2, compute_dtype=jnp.float32, block_b=128))
    assert out2.shape == (B2, 10)
    assert jnp.allclose(out2, ref2, atol=1e-5, rtol=1e-5)

    print("KERNEL_OK")
</pallas_src>

<mosaic_0001>
module attributes {stable_mosaic.version = 11 : i64} {
  func.func @mlp_kernel(%arg0: i32, %arg1: memref<8x20xf32, #tpu.memory_space<vmem>>, %arg2: memref<20x256xf32, #tpu.memory_space<vmem>>, %arg3: memref<1x256xf32, #tpu.memory_space<vmem>>, %arg4: memref<256x10xf32, #tpu.memory_space<vmem>>, %arg5: memref<1x10xf32, #tpu.memory_space<vmem>>, %arg6: memref<8x10xf32, #tpu.memory_space<vmem>>) attributes {dimension_semantics = [#tpu.dimension_semantics<parallel>], iteration_bounds = array<i64: 1>, scalar_prefetch = 0 : i64, scratch_operands = 0 : i64, tpu.core_type = #tpu.core_type<tc>, window_params = [{transform_indices = @transform_0, window_bounds = array<i64: 8, 20>}, {pipeline_mode = #tpu.pipeline_mode<synchronous>, transform_indices = @transform_1, window_bounds = array<i64: 20, 256>}, {pipeline_mode = #tpu.pipeline_mode<synchronous>, transform_indices = @transform_2, window_bounds = array<i64: 1, 256>}, {pipeline_mode = #tpu.pipeline_mode<synchronous>, transform_indices = @transform_3, window_bounds = array<i64: 256, 10>}, {pipeline_mode = #tpu.pipeline_mode<synchronous>, transform_indices = @transform_4, window_bounds = array<i64: 1, 10>}, {transform_indices = @transform_5, window_bounds = array<i64: 8, 10>}]} {
    %c0 = arith.constant 0 : index
    %c0_0 = arith.constant 0 : index
    %0 = vector.load %arg1[%c0, %c0_0] : memref<8x20xf32, #tpu.memory_space<vmem>>, vector<8x20xf32>
    %c0_1 = arith.constant 0 : index
    %c0_2 = arith.constant 0 : index
    %1 = vector.load %arg2[%c0_1, %c0_2] : memref<20x256xf32, #tpu.memory_space<vmem>>, vector<20x256xf32>
    %cst = arith.constant dense<0.000000e+00> : vector<8x256xf32>
    %2 = tpu.matmul %0, %1, %cst {dimension_numbers = #tpu.dot_dimension_numbers<[1], [0], [0], [1], [0, 0, 1, 1], [], []>} : vector<8x20xf32>, vector<20x256xf32>, vector<8x256xf32> -> vector<8x256xf32>
    %c0_3 = arith.constant 0 : index
    %c0_4 = arith.constant 0 : index
    %3 = vector.load %arg3[%c0_3, %c0_4] : memref<1x256xf32, #tpu.memory_space<vmem>>, vector<1x256xf32>
    %4 = vector.broadcast %3 : vector<1x256xf32> to vector<8x256xf32>
    %5 = arith.addf %2, %4 : vector<8x256xf32>
    %cst_5 = arith.constant 0.000000e+00 : f32
    %6 = vector.broadcast %cst_5 : f32 to vector<8x256xf32>
    %7 = arith.maximumf %5, %6 : vector<8x256xf32>
    %c0_6 = arith.constant 0 : index
    %c0_7 = arith.constant 0 : index
    %8 = vector.load %arg4[%c0_6, %c0_7] : memref<256x10xf32, #tpu.memory_space<vmem>>, vector<256x10xf32>
    %cst_8 = arith.constant dense<0.000000e+00> : vector<8x10xf32>
    %9 = tpu.matmul %7, %8, %cst_8 {dimension_numbers = #tpu.dot_dimension_numbers<[1], [0], [0], [1], [0, 0, 1, 1], [], []>} : vector<8x256xf32>, vector<256x10xf32>, vector<8x10xf32> -> vector<8x10xf32>
    %c0_9 = arith.constant 0 : index
    %c0_10 = arith.constant 0 : index
    %10 = vector.load %arg5[%c0_9, %c0_10] : memref<1x10xf32, #tpu.memory_space<vmem>>, vector<1x10xf32>
    %11 = vector.broadcast %10 : vector<1x10xf32> to vector<8x10xf32>
    %12 = arith.addf %9, %11 : vector<8x10xf32>
    %c0_11 = arith.constant 0 : index
    %c0_12 = arith.constant 0 : index
    %13 = vector.load %arg6[%c0_11, %c0_12] : memref<8x10xf32, #tpu.memory_space<vmem>>, vector<8x10xf32>
    tpu.vector_store %arg6[%c0_11, %c0_12], %12 {strides = array<i32>} : memref<8x10xf32, #tpu.memory_space<vmem>>, vector<8x10xf32>,
    return
  }
  func.func @transform_0(%arg0: i32) -> (i32, i32) {
    %c0_i32 = arith.constant 0 : i32
    %c0_i32_0 = arith.constant 0 : i32
    return %arg0, %c0_i32 : i32, i32
  }
  func.func @transform_1(%arg0: i32) -> (i32, i32) {
    %c0_i32 = arith.constant 0 : i32
    %c0_i32_0 = arith.constant 0 : i32
    %c0_i32_1 = arith.constant 0 : i32
    return %c0_i32, %c0_i32_0 : i32, i32
  }
  func.func @transform_2(%arg0: i32) -> (i32, i32) {
    %c0_i32 = arith.constant 0 : i32
    %c0_i32_0 = arith.constant 0 : i32
    %c0_i32_1 = arith.constant 0 : i32
    return %c0_i32, %c0_i32_0 : i32, i32
  }
  func.func @transform_3(%arg0: i32) -> (i32, i32) {
    %c0_i32 = arith.constant 0 : i32
    %c0_i32_0 = arith.constant 0 : i32
    %c0_i32_1 = arith.constant 0 : i32
    return %c0_i32, %c0_i32_0 : i32, i32
  }
  func.func @transform_4(%arg0: i32) -> (i32, i32) {
    %c0_i32 = arith.constant 0 : i32
    %c0_i32_0 = arith.constant 0 : i32
    %c0_i32_1 = arith.constant 0 : i32
    return %c0_i32, %c0_i32_0 : i32, i32
  }
  func.func @transform_5(%arg0: i32) -> (i32, i32) {
    %c0_i32 = arith.constant 0 : i32
    %c0_i32_0 = arith.constant 0 : i32
    return %arg0, %c0_i32 : i32, i32
  }
}

</mosaic_0001>

<llo_original>
// kernel: mlp_forward.1
$region0: #{mlp_forward.1}
  #allocation0 [shape = 'u32[]', space=smem, size = 0x4, offset = 0x4, fixed_abs, tag = 'smem constant byte address 0x4 - core index']
  #allocation1 [shape = 'u32[144,128]{1,0:T(1,128)}', space=vmem, size = 0x12000, scoped, tag = 'internal scratch']
  %s0 = inlined_call_operand.vmem [shape: f32[8,20], index: 0, kind: input, shape index: {}]
  %s1 = inlined_call_operand.vmem [shape: f32[20,256], index: 1, kind: input, shape index: {}]
  %s2 = inlined_call_operand.vmem [shape: f32[1,256], index: 2, kind: input, shape index: {}]
  %s3 = inlined_call_operand.vmem [shape: f32[256,10], index: 3, kind: input, shape index: {}]
  %s4 = inlined_call_operand.vmem [shape: f32[1,10], index: 4, kind: input, shape index: {}]
  %s5 = inlined_call_operand.vmem [shape: f32[8,10], index: 5, kind: output, shape index: {}]
  %s6 = sld [smem:[#allocation0]]
  $region30: #{mlp_forward.1} parent=0
    _
  %s8 = ssub.s32 1, %s6
  %s9 = scalar_select 0, %s8, %s6
  // Predicated region
  $region2: #{mlp_forward.1} parent=0 // pred_check
    _
  $region3: #{mlp_forward.1} parent=0 // pred_check_branch
    %11 = sbr.rel (0) target = $region5
  $region4: #{mlp_forward.1} parent=0 // pred_region
    _
  $region5: #{mlp_forward.1} parent=0 // pred_fallthru
    _
  // Predicated region
  $region6: #{mlp_forward.1} parent=0 // pred_check
    _
  $region7: #{mlp_forward.1} parent=0 // pred_check_branch
    %13 = sbr.rel (0) target = $region9
  $region8: #{mlp_forward.1} parent=0 // pred_region
    _
  $region9: #{mlp_forward.1} parent=0 // pred_fallthru
    _
  // Predicated region
  $region10: #{mlp_forward.1} parent=0 // pred_check
    _
  $region11: #{mlp_forward.1} parent=0 // pred_check_branch
    %15 = sbr.rel (0) target = $region13
  $region12: #{mlp_forward.1} parent=0 // pred_region
    _
  $region13: #{mlp_forward.1} parent=0 // pred_fallthru
    _
  // Predicated region
  $region14: #{mlp_forward.1} parent=0 // pred_check
    _
  $region15: #{mlp_forward.1} parent=0 // pred_check_branch
    %17 = sbr.rel (0) target = $region17
  $region16: #{mlp_forward.1} parent=0 // pred_region
    _
  $region17: #{mlp_forward.1} parent=0 // pred_fallthru
    _
  // Predicated region
  $region18: #{mlp_forward.1} parent=0 // pred_check
    _
  $region19: #{mlp_forward.1} parent=0 // pred_check_branch
    %19 = sbr.rel (0) target = $region21
  $region20: #{mlp_forward.1} parent=0 // pred_region
    _
  $region21: #{mlp_forward.1} parent=0 // pred_fallthru
    _
  %v20 = vld [vmem:[%s0] sm:$0xff]
  %v21 = vld [vmem:[%s1] sm:$0xff]
  %v22 = vld [vmem:[%s1 + $0x8] sm:$0xff]
  %v23 = vld [vmem:[%s1 + $0x10] sm:$0xff]
  %v24 = vld [vmem:[%s1 + $0x18] sm:$0xff]
  %v25 = vld [vmem:[%s1 + $0x20] sm:$0xf]
  %v26 = vld [vmem:[%s1 + $0x28] sm:$0xf]
  %v27 = vld [vmem:[%s2] sm:$0x3]
  %v29 = vlaneseq
  %v30 = vshrl.u32 %v29, 7
  %v31 = vsub.s32 0, %v30
  %v32 = vrot.slane %v27, %v31
  %v33 = vlaneseq
  %v34 = vshrl.u32 %v33, 7
  %v35 = vsub.s32 1, %v34
  %v36 = vrot.slane %v27, %v35
  %vm39 = vcmask 162816
  %v41 = vsel %vm39, %v20, 0
  %vm43 = vcmask 1043456
  %v45 = vsel %vm43, %v25, 0
  %v48 = vsel %vm43, %v26, 0
  %50 = vmatprep.subr.mxu0 0.0
  %51 = vmatpush1.msra.mxu0 0.0
  %52 = vmatprep.subr.mxu0 0.0
  %53 = vmatpush1.msra.mxu0 0.0
  %54 = vmatprep.subr.mxu0 0.0
  %55 = vmatpush1.msra.mxu0 0.0
  %56 = vmatprep.subr.mxu0 0.0
  %57 = vmatpush1.msra.mxu0 0.0
  %58 = vmatprep.subr.mxu0 0.0
  %59 = vmatpush1.msra.mxu0 0.0
  %60 = vmatprep.subr.mxu0 0.0
  %61 = vmatpush1.msra.mxu0 0.0
  %62 = vmatprep.subr.mxu0 0.0
  %63 = vmatpush1.msra.mxu0 0.0
  %64 = vmatprep.subr.mxu0 0.0
  %65 = vmatpush1.msra.mxu0 0.0
  %66 = vmatprep.subr.mxu0 0.0
  %67 = vmatpush1.msra.mxu0 0.0
  %68 = vmatprep.subr.mxu0 0.0
  %69 = vmatpush1.msra.mxu0 0.0
  %70 = vmatprep.subr.mxu0 0.0
  %71 = vmatpush1.msra.mxu0 0.0
  %72 = vmatprep.subr.mxu0 0.0
  %73 = vmatpush1.msra.mxu0 0.0
  %74 = vmatprep.subr.mxu0 0.0
  %75 = vmatpush1.msra.mxu0 0.0
  %76 = vmatprep.subr.mxu0 %v48
  %77 = vmatpush1.msra.mxu0 %v45
  %78 = vmatprep.subr.mxu0 %v24
  %79 = vmatpush1.msra.mxu0 %v23
  %80 = vmatprep.subr.mxu0 %v22
  %81 = vmatpush1.msra.mxu0 %v21
  %82 = vmatprep.subr.mxu0 0.0
  %83 = vmatpush2.msra.mxu0 0.0
  %84 = vmatprep.subr.mxu0 0.0
  %85 = vmatpush2.msra.mxu0 0.0
  %86 = vmatprep.subr.mxu0 0.0
  %87 = vmatpush2.msra.mxu0 0.0
  %88 = vmatprep.subr.mxu0 0.0
  %89 = vmatpush2.msra.mxu0 0.0
  %90 = vmatprep.subr.mxu0 0.0
  %91 = vmatpush2.msra.mxu0 0.0
  %92 = vmatprep.subr.mxu0 0.0
  %93 = vmatpush2.msra.mxu0 0.0
  %94 = vmatprep.subr.mxu0 0.0
  %95 = vmatpush2.msra.mxu0 0.0
  %96 = vmatprep.subr.mxu0 0.0
  %97 = vmatpush2.msra.mxu0 0.0
  %98 = vmatprep.subr.mxu0 0.0
  %99 = vmatpush2.msra.mxu0 0.0
  %100 = vmatprep.subr.mxu0 0.0
  %101 = vmatpush2.msra.mxu0 0.0
  %102 = vmatprep.subr.mxu0 0.0
  %103 = vmatpush2.msra.mxu0 0.0
  %104 = vmatprep.subr.mxu0 0.0
  %105 = vmatpush2.msra.mxu0 0.0
  %106 = vmatprep.subr.mxu0 0.0
  %107 = vmatpush2.msra.mxu0 0.0
  %108 = vmatprep.subr.mxu0 0.0
  %109 = vmatpush2.msra.mxu0 0.0
  %110 = vmatprep.subr.mxu0 0.0
  %111 = vmatpush2.msra.mxu0 0.0
  %112 = vmatprep.subr.mxu0 0.0
  %113 = vmatpush2.msra.mxu0 0.0
  %114 = vmatprep.mubr.f32.mxu0 0.0
  %115 = vmatmul.mubr.f32.gmra.mxu0 %v41
  %v116 = vpop.f32.mrf.mxu0
  %v117 = vadd.f32 %v32, %v116
  %v118 = vpop.f32.mrf.mxu0
  %v119 = vadd.f32 %v36, %v118
  %120 = vdwg.mxu0
  %v121 = vmax.f32 %v117, 0.0
  %v122 = vmax.f32 %v119, 0.0
  %v123 = vld [vmem:[%s3] sm:$0xff]
  %v124 = vld [vmem:[%s3 + $0x8] sm:$0xff]
  %v125 = vld [vmem:[%s3 + $0x10] sm:$0xff]
  %v126 = vld [vmem:[%s3 + $0x18] sm:$0xff]
  %v127 = vld [vmem:[%s3 + $0x20] sm:$0xff]
  %v128 = vld [vmem:[%s3 + $0x28] sm:$0xff]
  %v129 = vld [vmem:[%s3 + $0x30] sm:$0xff]
  %v130 = vld [vmem:[%s3 + $0x38] sm:$0xff]
  %v131 = vld [vmem:[%s3 + $0x40] sm:$0xff]
  %v132 = vld [vmem:[%s3 + $0x48] sm:$0xff]
  %v133 = vld [vmem:[%s3 + $0x50] sm:$0xff]
  %v134 = vld [vmem:[%s3 + $0x58] sm:$0xff]
  %v135 = vld [vmem:[%s3 + $0x60] sm:$0xff]
  %v136 = vld [vmem:[%s3 + $0x68] sm:$0xff]
  %v137 = vld [vmem:[%s3 + $0x70] sm:$0xff]
  %v138 = vld [vmem:[%s3 + $0x78] sm:$0xff]
  %v139 = vld [vmem:[%s3 + $0x80] sm:$0xff]
  %v140 = vld [vmem:[%s3 + $0x88] sm:$0xff]
  %v141 = vld [vmem:[%s3 + $0x90] sm:$0xff]
  %v142 = vld [vmem:[%s3 + $0x98] sm:$0xff]
  %v143 = vld [vmem:[%s3 + $0xa0] sm:$0xff]
  %v144 = vld [vmem:[%s3 + $0xa8] sm:$0xff]
  %v145 = vld [vmem:[%s3 + $0xb0] sm:$0xff]
  %v146 = vld [vmem:[%s3 + $0xb8] sm:$0xff]
  %v147 = vld [vmem:[%s3 + $0xc0] sm:$0xff]
  %v148 = vld [vmem:[%s3 + $0xc8] sm:$0xff]
  %v149 = vld [vmem:[%s3 + $0xd0] sm:$0xff]
  %v150 = vld [vmem:[%s3 + $0xd8] sm:$0xff]
  %v151 = vld [vmem:[%s3 + $0xe0] sm:$0xff]
  %v152 = vld [vmem:[%s3 + $0xe8] sm:$0xff]
  %v153 = vld [vmem:[%s3 + $0xf0] sm:$0xff]
  %v154 = vld [vmem:[%s3 + $0xf8] sm:$0xff]
  %v155 = vld [vmem:[%s4] sm:$0x1]
  %v157 = vlaneseq
  %v158 = vshrl.u32 %v157, 7
  %v159 = vsub.s32 0, %v158
  %v160 = vrot.slane %v155, %v159
  %162 = vmatprep.subr.mxu0 0.0
  %163 = vmatpush1.msra.mxu0 %v138
  %164 = vmatprep.subr.mxu0 0.0
  %165 = vmatpush1.msra.mxu0 %v137
  %166 = vmatprep.subr.mxu0 0.0
  %167 = vmatpush1.msra.mxu0 %v136
  %168 = vmatprep.subr.mxu0 0.0
  %169 = vmatpush1.msra.mxu0 %v135
  %170 = vmatprep.subr.mxu0 0.0
  %171 = vmatpush1.msra.mxu0 %v134
  %172 = vmatprep.subr.mxu0 0.0
  %173 = vmatpush1.msra.mxu0 %v133
  %174 = vmatprep.subr.mxu0 0.0
  %175 = vmatpush1.msra.mxu0 %v132
  %176 = vmatprep.subr.mxu0 0.0
  %177 = vmatpush1.msra.mxu0 %v131
  %178 = vmatprep.subr.mxu0 0.0
  %179 = vmatpush1.msra.mxu0 %v130
  %180 = vmatprep.subr.mxu0 0.0
  %181 = vmatpush1.msra.mxu0 %v129
  %182 = vmatprep.subr.mxu0 0.0
  %183 = vmatpush1.msra.mxu0 %v128
  %184 = vmatprep.subr.mxu0 0.0
  %185 = vmatpush1.msra.mxu0 %v127
  %186 = vmatprep.subr.mxu0 0.0
  %187 = vmatpush1.msra.mxu0 %v126
  %188 = vmatprep.subr.mxu0 0.0
  %189 = vmatpush1.msra.mxu0 %v125
  %190 = vmatprep.subr.mxu0 0.0
  %191 = vmatpush1.msra.mxu0 %v124
  %192 = vmatprep.subr.mxu0 0.0
  %193 = vmatpush1.msra.mxu0 %v123
  %194 = vmatprep.subr.mxu0 0.0
  %195 = vmatpush2.msra.mxu0 %v154
  %196 = vmatprep.subr.mxu0 0.0
  %197 = vmatpush2.msra.mxu0 %v153
  %198 = vmatprep.subr.mxu0 0.0
  %199 = vmatpush2.msra.mxu0 %v152
  %200 = vmatprep.subr.mxu0 0.0
  %201 = vmatpush2.msra.mxu0 %v151
  %202 = vmatprep.subr.mxu0 0.0
  %203 = vmatpush2.msra.mxu0 %v150
  %204 = vmatprep.subr.mxu0 0.0
  %205 = vmatpush2.msra.mxu0 %v149
  %206 = vmatprep.subr.mxu0 0.0
  %207 = vmatpush2.msra.mxu0 %v148
  %208 = vmatprep.subr.mxu0 0.0
  %209 = vmatpush2.msra.mxu0 %v147
  %210 = vmatprep.subr.mxu0 0.0
  %211 = vmatpush2.msra.mxu0 %v146
  %212 = vmatprep.subr.mxu0 0.0
  %213 = vmatpush2.msra.mxu0 %v145
  %214 = vmatprep.subr.mxu0 0.0
  %215 = vmatpush2.msra.mxu0 %v144
  %216 = vmatprep.subr.mxu0 0.0
  %217 = vmatpush2.msra.mxu0 %v143
  %218 = vmatprep.subr.mxu0 0.0
  %219 = vmatpush2.msra.mxu0 %v142
  %220 = vmatprep.subr.mxu0 0.0
  %221 = vmatpush2.msra.mxu0 %v141
  %222 = vmatprep.subr.mxu0 0.0
  %223 = vmatpush2.msra.mxu0 %v140
  %224 = vmatprep.subr.mxu0 0.0
  %225 = vmatpush2.msra.mxu0 %v139
  %226 = vmatprep.mubr.f32.mxu0 %v122
  %227 = vmatmul.mubr.f32.gmra.mxu0 %v121
  %v228 = vpop.f32.mrf.mxu0
  %v229 = vadd.f32 %v160, %v228
  %v230 = vpop.f32.mrf.mxu0
  %231 = vdwg.mxu0
  %vm232 = vcmask 80896
  %233 = vst.msk [vmem:[%s5] sm:$0xff] %vm232, %v229
  // Predicated region
  $region22: #{mlp_forward.1} parent=0 // pred_check
    _
  $region23: #{mlp_forward.1} parent=0 // pred_check_branch
    %235 = sbr.rel (0) target = $region25
  $region24: #{mlp_forward.1} parent=0 // pred_region
    _
  $region25: #{mlp_forward.1} parent=0 // pred_fallthru
    _
  // Predicated region
  $region26: #{mlp_forward.1} parent=0 // pred_check
    _
  $region27: #{mlp_forward.1} parent=0 // pred_check_branch
    %237 = sbr.rel (0) target = $region29
  $region28: #{mlp_forward.1} parent=0 // pred_region
    _
  $region29: #{mlp_forward.1} parent=0 // pred_fallthru
    _

</llo_original>
